<compile_context>
chip_gen: v6e
topology: v6e:2x2x1
jax: 0.10.0
libtpu: 0.0.40
codegen_flags: <defaults>
</compile_context>

<pallas_src>
import functools

import jax
import jax.numpy as jnp
from jax.experimental import pallas as pl
from jax.experimental.pallas import tpu as pltpu

_SUBLANE = 8


def _round_up(x, m):
    return ((x + m - 1) // m) * m


def _num_tensorcores():
    """2 on multi-TensorCore parts (v7x, v4, v5p), else 1 (v5e, v6e)."""
    try:
        kind = jax.devices()[0].device_kind.lower()
    except Exception:
        return 1
    if "v7" in kind or "v5p" in kind or "v4" in kind:
        return 2
    return 1


def _gcn_mlp_kernel(x_ref, w1_ref, b1_ref, w2_ref, b2_ref, w3_ref, b3_ref,
                    o_ref, *, matmul_dtype):
    # Layer 1: Linear + ReLU  (dropout p=0.2 is identity in eval mode)
    x = x_ref[...].astype(matmul_dtype)
    h1 = jnp.dot(x, w1_ref[...].astype(matmul_dtype),
                 preferred_element_type=jnp.float32)
    h1 = jnp.maximum(h1 + b1_ref[...], 0.0)
    # Layer 2: Linear + ReLU  (dropout p=0.2 is identity in eval mode)
    h2 = jnp.dot(h1.astype(matmul_dtype), w2_ref[...].astype(matmul_dtype),
                 preferred_element_type=jnp.float32)
    h2 = jnp.maximum(h2 + b2_ref[...], 0.0)
    # Output layer: Linear + sigmoid (tanh form: single EUP op, bounded even
    # on the masked-out garbage rows of a partial last batch tile).
    out = jnp.dot(h2.astype(matmul_dtype), w3_ref[...].astype(matmul_dtype),
                  preferred_element_type=jnp.float32) + b3_ref[...]
    o_ref[...] = (0.5 * (jnp.tanh(0.5 * out) + 1.0)).astype(o_ref.dtype)


def gcn_mlp_forward(x, w1, b1, w2, b2, w3, b3, *, tm=2048, use_bf16_matmul=False):
    """x: (N, input_dim) f32.  Weights: (in, out).  Biases: (out,) or (1, out)."""
    N, input_dim = x.shape
    hidden1 = w1.shape[1]
    hidden2 = w2.shape[1]
    output_dim = w3.shape[1]

    f32 = jnp.float32
    x = x.astype(f32)
    w1 = w1.astype(f32)
    w2 = w2.astype(f32)
    w3 = w3.astype(f32)
    b1 = b1.astype(f32).reshape(1, hidden1)
    b2 = b2.astype(f32).reshape(1, hidden2)
    b3 = b3.astype(f32).reshape(1, output_dim)

    # Batch tile: largest sublane-aligned tile <= tm.  Cap to >= 2 grid steps
    # only when the chip actually has two TensorCores to shard the 'parallel'
    # axis across; on 1-TC parts the cap would just double per-step overhead.
    if _num_tensorcores() >= 2:
        cap = max(_SUBLANE, _round_up(pl.cdiv(N, 2), _SUBLANE))
    else:
        cap = _round_up(N, _SUBLANE)
    tm_eff = _round_up(min(int(tm), int(cap)), _SUBLANE)

    # Partial last tile: OOB rows are read as garbage and masked on the write.
    grid = (pl.cdiv(N, tm_eff),)

    matmul_dtype = jnp.bfloat16 if use_bf16_matmul else jnp.float32
    kernel = functools.partial(_gcn_mlp_kernel, matmul_dtype=matmul_dtype)

    return pl.pallas_call(
        kernel,
        out_shape=jax.ShapeDtypeStruct((N, output_dim), f32),
        grid_spec=pltpu.PrefetchScalarGridSpec(
            num_scalar_prefetch=0,
            grid=grid,
            in_specs=[
                # x tiled over batch only; last dim = full array dim (legal
                # even when < 128), so no pad copy and no inflated HBM read.
                pl.BlockSpec((tm_eff, input_dim), lambda i: (i, 0)),
                # Params: full-array blocks, constant index_map -> fetched
                # once and VMEM-resident across grid steps.
                pl.BlockSpec((input_dim, hidden1), lambda i: (0, 0)),
                pl.BlockSpec((1, hidden1), lambda i: (0, 0)),
                pl.BlockSpec((hidden1, hidden2), lambda i: (0, 0)),
                pl.BlockSpec((1, hidden2), lambda i: (0, 0)),
                pl.BlockSpec((hidden2, output_dim), lambda i: (0, 0)),
                pl.BlockSpec((1, output_dim), lambda i: (0, 0)),
            ],
            # True output width (e.g. 4): ~32x less HBM write traffic than a
            # 128-lane padded block; masked vst lands in a slot with slack on
            # this DMA-bound kernel.
            out_specs=pl.BlockSpec((tm_eff, output_dim), lambda i: (i, 0)),
        ),
        compiler_params=pltpu.CompilerParams(
            dimension_semantics=("parallel",),
        ),
    )(x, w1, b1, w2, b2, w3, b3)


def init_params(key, input_dim, hidden1, hidden2, output_dim):
    """Deterministic synthetic parameters (PyTorch-like uniform fan-in init)."""
    ks = jax.random.split(key, 6)

    def linear(kw, kb, fan_in, fan_out):
        bound = 1.0 / jnp.sqrt(fan_in)
        w = jax.random.uniform(kw, (fan_in, fan_out), jnp.float32, -bound, bound)
        b = jax.random.uniform(kb, (1, fan_out), jnp.float32, -bound, bound)
        return w, b

    w1, b1 = linear(ks[0], ks[1], input_dim, hidden1)
    w2, b2 = linear(ks[2], ks[3], hidden1, hidden2)
    w3, b3 = linear(ks[4], ks[5], hidden2, output_dim)
    return w1, b1, w2, b2, w3, b3


def reference_forward(x, w1, b1, w2, b2, w3, b3):
    h1 = jnp.maximum(x @ w1 + b1, 0.0)
    h2 = jnp.maximum(h1 @ w2 + b2, 0.0)
    return jax.nn.sigmoid(h2 @ w3 + b3)


if __name__ == "__main__":
    # Small shapes consistent with gcn_MLP(input_dim, hidden_dim1, hidden_dim2,
    # output_dim).  batch=19 deliberately exercises the partial-last-tile path.
    batch, input_dim, hidden1, hidden2, output_dim = 19, 32, 64, 32, 4

    key = jax.random.PRNGKey(0)
    k_x, k_p = jax.random.split(key)
    x = jax.random.normal(k_x, (batch, input_dim), jnp.float32)
    params = init_params(k_p, input_dim, hidden1, hidden2, output_dim)

    out = gcn_mlp_forward(x, *params)
    out = jax.block_until_ready(out)

    ref = reference_forward(x, *params)
    assert out.shape == (batch, output_dim)
    assert jnp.allclose(out, ref, atol=1e-5, rtol=1e-5), "mismatch vs reference"

    print("KERNEL_OK")
</pallas_src>

<mosaic_0001>
module attributes {stable_mosaic.version = 11 : i64} {
  func.func @_gcn_mlp_kernel(%arg0: i32, %arg1: memref<24x32xf32, #tpu.memory_space<vmem>>, %arg2: memref<32x64xf32, #tpu.memory_space<vmem>>, %arg3: memref<1x64xf32, #tpu.memory_space<vmem>>, %arg4: memref<64x32xf32, #tpu.memory_space<vmem>>, %arg5: memref<1x32xf32, #tpu.memory_space<vmem>>, %arg6: memref<32x4xf32, #tpu.memory_space<vmem>>, %arg7: memref<1x4xf32, #tpu.memory_space<vmem>>, %arg8: memref<24x4xf32, #tpu.memory_space<vmem>>) attributes {dimension_semantics = [#tpu.dimension_semantics<parallel>], iteration_bounds = array<i64: 1>, scalar_prefetch = 0 : i64, scratch_operands = 0 : i64, tpu.core_type = #tpu.core_type<tc>, window_params = [{transform_indices = @transform_0, window_bounds = array<i64: 24, 32>}, {pipeline_mode = #tpu.pipeline_mode<synchronous>, transform_indices = @transform_1, window_bounds = array<i64: 32, 64>}, {pipeline_mode = #tpu.pipeline_mode<synchronous>, transform_indices = @transform_2, window_bounds = array<i64: 1, 64>}, {pipeline_mode = #tpu.pipeline_mode<synchronous>, transform_indices = @transform_3, window_bounds = array<i64: 64, 32>}, {pipeline_mode = #tpu.pipeline_mode<synchronous>, transform_indices = @transform_4, window_bounds = array<i64: 1, 32>}, {pipeline_mode = #tpu.pipeline_mode<synchronous>, transform_indices = @transform_5, window_bounds = array<i64: 32, 4>}, {pipeline_mode = #tpu.pipeline_mode<synchronous>, transform_indices = @transform_6, window_bounds = array<i64: 1, 4>}, {transform_indices = @transform_7, window_bounds = array<i64: 24, 4>}]} {
    %c0 = arith.constant 0 : index
    %c0_0 = arith.constant 0 : index
    %0 = vector.load %arg1[%c0, %c0_0] : memref<24x32xf32, #tpu.memory_space<vmem>>, vector<24x32xf32>
    %c0_1 = arith.constant 0 : index
    %c0_2 = arith.constant 0 : index
    %1 = vector.load %arg2[%c0_1, %c0_2] : memref<32x64xf32, #tpu.memory_space<vmem>>, vector<32x64xf32>
    %cst = arith.constant dense<0.000000e+00> : vector<24x64xf32>
    %2 = tpu.matmul %0, %1, %cst {dimension_numbers = #tpu.dot_dimension_numbers<[1], [0], [0], [1], [0, 0, 1, 1], [], []>} : vector<24x32xf32>, vector<32x64xf32>, vector<24x64xf32> -> vector<24x64xf32>
    %c0_3 = arith.constant 0 : index
    %c0_4 = arith.constant 0 : index
    %3 = vector.load %arg3[%c0_3, %c0_4] : memref<1x64xf32, #tpu.memory_space<vmem>>, vector<1x64xf32>
    %4 = vector.broadcast %3 : vector<1x64xf32> to vector<24x64xf32>
    %5 = arith.addf %2, %4 : vector<24x64xf32>
    %cst_5 = arith.constant 0.000000e+00 : f32
    %6 = vector.broadcast %cst_5 : f32 to vector<24x64xf32>
    %7 = arith.maximumf %5, %6 : vector<24x64xf32>
    %c0_6 = arith.constant 0 : index
    %c0_7 = arith.constant 0 : index
    %8 = vector.load %arg4[%c0_6, %c0_7] : memref<64x32xf32, #tpu.memory_space<vmem>>, vector<64x32xf32>
    %cst_8 = arith.constant dense<0.000000e+00> : vector<24x32xf32>
    %9 = tpu.matmul %7, %8, %cst_8 {dimension_numbers = #tpu.dot_dimension_numbers<[1], [0], [0], [1], [0, 0, 1, 1], [], []>} : vector<24x64xf32>, vector<64x32xf32>, vector<24x32xf32> -> vector<24x32xf32>
    %c0_9 = arith.constant 0 : index
    %c0_10 = arith.constant 0 : index
    %10 = vector.load %arg5[%c0_9, %c0_10] : memref<1x32xf32, #tpu.memory_space<vmem>>, vector<1x32xf32>
    %11 = vector.broadcast %10 : vector<1x32xf32> to vector<24x32xf32>
    %12 = arith.addf %9, %11 : vector<24x32xf32>
    %cst_11 = arith.constant 0.000000e+00 : f32
    %13 = vector.broadcast %cst_11 : f32 to vector<24x32xf32>
    %14 = arith.maximumf %12, %13 : vector<24x32xf32>
    %c0_12 = arith.constant 0 : index
    %c0_13 = arith.constant 0 : index
    %15 = vector.load %arg6[%c0_12, %c0_13] : memref<32x4xf32, #tpu.memory_space<vmem>>, vector<32x4xf32>
    %cst_14 = arith.constant dense<0.000000e+00> : vector<24x4xf32>
    %16 = tpu.matmul %14, %15, %cst_14 {dimension_numbers = #tpu.dot_dimension_numbers<[1], [0], [0], [1], [0, 0, 1, 1], [], []>} : vector<24x32xf32>, vector<32x4xf32>, vector<24x4xf32> -> vector<24x4xf32>
    %c0_15 = arith.constant 0 : index
    %c0_16 = arith.constant 0 : index
    %17 = vector.load %arg7[%c0_15, %c0_16] : memref<1x4xf32, #tpu.memory_space<vmem>>, vector<1x4xf32>
    %18 = vector.broadcast %17 : vector<1x4xf32> to vector<24x4xf32>
    %19 = arith.addf %16, %18 : vector<24x4xf32>
    %cst_17 = arith.constant 5.000000e-01 : f32
    %20 = vector.broadcast %cst_17 : f32 to vector<24x4xf32>
    %21 = arith.mulf %20, %19 : vector<24x4xf32>
    %22 = math.tanh %21 : vector<24x4xf32>
    %cst_18 = arith.constant 1.000000e+00 : f32
    %23 = vector.broadcast %cst_18 : f32 to vector<24x4xf32>
    %24 = arith.addf %22, %23 : vector<24x4xf32>
    %cst_19 = arith.constant 5.000000e-01 : f32
    %25 = vector.broadcast %cst_19 : f32 to vector<24x4xf32>
    %26 = arith.mulf %25, %24 : vector<24x4xf32>
    %c0_20 = arith.constant 0 : index
    %c0_21 = arith.constant 0 : index
    %27 = vector.load %arg8[%c0_20, %c0_21] : memref<24x4xf32, #tpu.memory_space<vmem>>, vector<24x4xf32>
    tpu.vector_store %arg8[%c0_20, %c0_21], %26 {strides = array<i32>} : memref<24x4xf32, #tpu.memory_space<vmem>>, vector<24x4xf32>,
    return
  }
  func.func @transform_0(%arg0: i32) -> (i32, i32) {
    %c0_i32 = arith.constant 0 : i32
    %c0_i32_0 = arith.constant 0 : i32
    return %arg0, %c0_i32 : i32, i32
  }
  func.func @transform_1(%arg0: i32) -> (i32, i32) {
    %c0_i32 = arith.constant 0 : i32
    %c0_i32_0 = arith.constant 0 : i32
    %c0_i32_1 = arith.constant 0 : i32
    return %c0_i32, %c0_i32_0 : i32, i32
  }
  func.func @transform_2(%arg0: i32) -> (i32, i32) {
    %c0_i32 = arith.constant 0 : i32
    %c0_i32_0 = arith.constant 0 : i32
    %c0_i32_1 = arith.constant 0 : i32
    return %c0_i32, %c0_i32_0 : i32, i32
  }
  func.func @transform_3(%arg0: i32) -> (i32, i32) {
    %c0_i32 = arith.constant 0 : i32
    %c0_i32_0 = arith.constant 0 : i32
    %c0_i32_1 = arith.constant 0 : i32
    return %c0_i32, %c0_i32_0 : i32, i32
  }
  func.func @transform_4(%arg0: i32) -> (i32, i32) {
    %c0_i32 = arith.constant 0 : i32
    %c0_i32_0 = arith.constant 0 : i32
    %c0_i32_1 = arith.constant 0 : i32
    return %c0_i32, %c0_i32_0 : i32, i32
  }
  func.func @transform_5(%arg0: i32) -> (i32, i32) {
    %c0_i32 = arith.constant 0 : i32
    %c0_i32_0 = arith.constant 0 : i32
    %c0_i32_1 = arith.constant 0 : i32
    return %c0_i32, %c0_i32_0 : i32, i32
  }
  func.func @transform_6(%arg0: i32) -> (i32, i32) {
    %c0_i32 = arith.constant 0 : i32
    %c0_i32_0 = arith.constant 0 : i32
    %c0_i32_1 = arith.constant 0 : i32
    return %c0_i32, %c0_i32_0 : i32, i32
  }
  func.func @transform_7(%arg0: i32) -> (i32, i32) {
    %c0_i32 = arith.constant 0 : i32
    %c0_i32_0 = arith.constant 0 : i32
    return %arg0, %c0_i32 : i32, i32
  }
}

</mosaic_0001>

<llo_original>
// kernel: tpu_custom_call.1
$region0: #{tpu_custom_call.1}
  #allocation0 [shape = 'u32[]', space=smem, size = 0x4, offset = 0x4, fixed_abs, tag = 'smem constant byte address 0x4 - core index']
  #allocation1 [shape = 'u32[144,128]{1,0:T(1,128)}', space=vmem, size = 0x12000, scoped, tag = 'internal scratch']
  %s0 = inlined_call_operand.vmem [shape: f32[19,32], index: 0, kind: input, shape index: {}]
  %s1 = inlined_call_operand.vmem [shape: f32[32,64], index: 1, kind: input, shape index: {}]
  %s2 = inlined_call_operand.vmem [shape: f32[1,64], index: 2, kind: input, shape index: {}]
  %s3 = inlined_call_operand.vmem [shape: f32[64,32], index: 3, kind: input, shape index: {}]
  %s4 = inlined_call_operand.vmem [shape: f32[1,32], index: 4, kind: input, shape index: {}]
  %s5 = inlined_call_operand.vmem [shape: f32[32,4], index: 5, kind: input, shape index: {}]
  %s6 = inlined_call_operand.vmem [shape: f32[1,4], index: 6, kind: input, shape index: {}]
  %s7 = inlined_call_operand.vmem [shape: f32[19,4], index: 7, kind: output, shape index: {}]
  %s8 = sld [smem:[#allocation0]]
  $region38: #{tpu_custom_call.1} parent=0
    _
  %s10 = ssub.s32 1, %s8
  %s11 = scalar_select 0, %s10, %s8
  // Predicated region
  $region2: #{tpu_custom_call.1} parent=0 // pred_check
    _
  $region3: #{tpu_custom_call.1} parent=0 // pred_check_branch
    %13 = sbr.rel (0) target = $region5
  $region4: #{tpu_custom_call.1} parent=0 // pred_region
    _
  $region5: #{tpu_custom_call.1} parent=0 // pred_fallthru
    _
  // Predicated region
  $region6: #{tpu_custom_call.1} parent=0 // pred_check
    _
  $region7: #{tpu_custom_call.1} parent=0 // pred_check_branch
    %15 = sbr.rel (0) target = $region9
  $region8: #{tpu_custom_call.1} parent=0 // pred_region
    _
  $region9: #{tpu_custom_call.1} parent=0 // pred_fallthru
    _
  // Predicated region
  $region10: #{tpu_custom_call.1} parent=0 // pred_check
    _
  $region11: #{tpu_custom_call.1} parent=0 // pred_check_branch
    %17 = sbr.rel (0) target = $region13
  $region12: #{tpu_custom_call.1} parent=0 // pred_region
    _
  $region13: #{tpu_custom_call.1} parent=0 // pred_fallthru
    _
  // Predicated region
  $region14: #{tpu_custom_call.1} parent=0 // pred_check
    _
  $region15: #{tpu_custom_call.1} parent=0 // pred_check_branch
    %19 = sbr.rel (0) target = $region17
  $region16: #{tpu_custom_call.1} parent=0 // pred_region
    _
  $region17: #{tpu_custom_call.1} parent=0 // pred_fallthru
    _
  // Predicated region
  $region18: #{tpu_custom_call.1} parent=0 // pred_check
    _
  $region19: #{tpu_custom_call.1} parent=0 // pred_check_branch
    %21 = sbr.rel (0) target = $region21
  $region20: #{tpu_custom_call.1} parent=0 // pred_region
    _
  $region21: #{tpu_custom_call.1} parent=0 // pred_fallthru
    _
  // Predicated region
  $region22: #{tpu_custom_call.1} parent=0 // pred_check
    _
  $region23: #{tpu_custom_call.1} parent=0 // pred_check_branch
    %23 = sbr.rel (0) target = $region25
  $region24: #{tpu_custom_call.1} parent=0 // pred_region
    _
  $region25: #{tpu_custom_call.1} parent=0 // pred_fallthru
    _
  // Predicated region
  $region26: #{tpu_custom_call.1} parent=0 // pred_check
    _
  $region27: #{tpu_custom_call.1} parent=0 // pred_check_branch
    %25 = sbr.rel (0) target = $region29
  $region28: #{tpu_custom_call.1} parent=0 // pred_region
    _
  $region29: #{tpu_custom_call.1} parent=0 // pred_fallthru
    _
  %v26 = vld [vmem:[%s0] sm:$0xff]
  %v27 = vld [vmem:[%s0 + $0x8] sm:$0xff]
  %v28 = vld [vmem:[%s0 + $0x10] sm:$0xff]
  %v29 = vld [vmem:[%s1] sm:$0xff]
  %v30 = vld [vmem:[%s1 + $0x8] sm:$0xff]
  %v31 = vld [vmem:[%s1 + $0x10] sm:$0xff]
  %v32 = vld [vmem:[%s1 + $0x18] sm:$0xff]
  %v33 = vld [vmem:[%s2] sm:$0x1]
  %v35 = vlaneseq
  %v36 = vshrl.u32 %v35, 7
  %v37 = vsub.s32 0, %v36
  %v38 = vrot.slane %v33, %v37
  %vm40 = vcmask 261120
  %v42 = vsel %vm40, %v26, 0
  %v45 = vsel %vm40, %v27, 0
  %v48 = vsel %vm40, %v28, 0
  %50 = vmatprep.subr.mxu0 0.0
  %51 = vmatpush1.msra.mxu0 0.0
  %52 = vmatprep.subr.mxu0 0.0
  %53 = vmatpush1.msra.mxu0 0.0
  %54 = vmatprep.subr.mxu0 0.0
  %55 = vmatpush1.msra.mxu0 0.0
  %56 = vmatprep.subr.mxu0 0.0
  %57 = vmatpush1.msra.mxu0 0.0
  %58 = vmatprep.subr.mxu0 0.0
  %59 = vmatpush1.msra.mxu0 0.0
  %60 = vmatprep.subr.mxu0 0.0
  %61 = vmatpush1.msra.mxu0 0.0
  %62 = vmatprep.subr.mxu0 0.0
  %63 = vmatpush1.msra.mxu0 0.0
  %64 = vmatprep.subr.mxu0 0.0
  %65 = vmatpush1.msra.mxu0 0.0
  %66 = vmatprep.subr.mxu0 0.0
  %67 = vmatpush1.msra.mxu0 0.0
  %68 = vmatprep.subr.mxu0 0.0
  %69 = vmatpush1.msra.mxu0 0.0
  %70 = vmatprep.subr.mxu0 0.0
  %71 = vmatpush1.msra.mxu0 0.0
  %72 = vmatprep.subr.mxu0 0.0
  %73 = vmatpush1.msra.mxu0 0.0
  %74 = vmatprep.subr.mxu0 0.0
  %75 = vmatpush1.msra.mxu0 %v32
  %76 = vmatprep.subr.mxu0 0.0
  %77 = vmatpush1.msra.mxu0 %v31
  %78 = vmatprep.subr.mxu0 0.0
  %79 = vmatpush1.msra.mxu0 %v30
  %80 = vmatprep.subr.mxu0 0.0
  %81 = vmatpush1.msra.mxu0 %v29
  %82 = vmatprep.subr.mxu0 0.0
  %83 = vmatpush2.msra.mxu0 0.0
  %84 = vmatprep.subr.mxu0 0.0
  %85 = vmatpush2.msra.mxu0 0.0
  %86 = vmatprep.subr.mxu0 0.0
  %87 = vmatpush2.msra.mxu0 0.0
  %88 = vmatprep.subr.mxu0 0.0
  %89 = vmatpush2.msra.mxu0 0.0
  %90 = vmatprep.subr.mxu0 0.0
  %91 = vmatpush2.msra.mxu0 0.0
  %92 = vmatprep.subr.mxu0 0.0
  %93 = vmatpush2.msra.mxu0 0.0
  %94 = vmatprep.subr.mxu0 0.0
  %95 = vmatpush2.msra.mxu0 0.0
  %96 = vmatprep.subr.mxu0 0.0
  %97 = vmatpush2.msra.mxu0 0.0
  %98 = vmatprep.subr.mxu0 0.0
  %99 = vmatpush2.msra.mxu0 0.0
  %100 = vmatprep.subr.mxu0 0.0
  %101 = vmatpush2.msra.mxu0 0.0
  %102 = vmatprep.subr.mxu0 0.0
  %103 = vmatpush2.msra.mxu0 0.0
  %104 = vmatprep.subr.mxu0 0.0
  %105 = vmatpush2.msra.mxu0 0.0
  %106 = vmatprep.subr.mxu0 0.0
  %107 = vmatpush2.msra.mxu0 0.0
  %108 = vmatprep.subr.mxu0 0.0
  %109 = vmatpush2.msra.mxu0 0.0
  %110 = vmatprep.subr.mxu0 0.0
  %111 = vmatpush2.msra.mxu0 0.0
  %112 = vmatprep.subr.mxu0 0.0
  %113 = vmatpush2.msra.mxu0 0.0
  %114 = vmatprep.mubr.f32.mxu0 0.0
  %115 = vmatmul.mubr.f32.gmra.mxu0 %v42
  %v116 = vpop.f32.mrf.mxu0
  %v117 = vadd.f32 %v38, %v116
  %v118 = vpop.f32.mrf.mxu0
  %119 = vmatprep.mubr.f32.mxu0 0.0
  %120 = vmatmul.mubr.f32.gmra.mxu0 %v45
  %v121 = vpop.f32.mrf.mxu0
  %v122 = vadd.f32 %v38, %v121
  %v123 = vpop.f32.mrf.mxu0
  %124 = vmatprep.mubr.f32.mxu0 0.0
  %125 = vmatmul.mubr.f32.gmra.mxu0 %v48
  %v126 = vpop.f32.mrf.mxu0
  %v127 = vadd.f32 %v38, %v126
  %v128 = vpop.f32.mrf.mxu0
  %129 = vdwg.mxu0
  %v130 = vmax.f32 %v117, 0.0
  %v131 = vmax.f32 %v122, 0.0
  %v132 = vmax.f32 %v127, 0.0
  %v133 = vld [vmem:[%s3] sm:$0xff]
  %v134 = vld [vmem:[%s3 + $0x8] sm:$0xff]
  %v135 = vld [vmem:[%s3 + $0x10] sm:$0xff]
  %v136 = vld [vmem:[%s3 + $0x18] sm:$0xff]
  %v137 = vld [vmem:[%s3 + $0x20] sm:$0xff]
  %v138 = vld [vmem:[%s3 + $0x28] sm:$0xff]
  %v139 = vld [vmem:[%s3 + $0x30] sm:$0xff]
  %v140 = vld [vmem:[%s3 + $0x38] sm:$0xff]
  %v141 = vld [vmem:[%s4] sm:$0x1]
  %v143 = vlaneseq
  %v144 = vshrl.u32 %v143, 7
  %v145 = vsub.s32 0, %v144
  %v146 = vrot.slane %v141, %v145
  %vm148 = vcmask 523264
  %v150 = vsel %vm148, %v130, 0
  %v153 = vsel %vm148, %v131, 0
  %v156 = vsel %vm148, %v132, 0
  %158 = vmatprep.subr.mxu0 0.0
  %159 = vmatpush1.msra.mxu0 0.0
  %160 = vmatprep.subr.mxu0 0.0
  %161 = vmatpush1.msra.mxu0 0.0
  %162 = vmatprep.subr.mxu0 0.0
  %163 = vmatpush1.msra.mxu0 0.0
  %164 = vmatprep.subr.mxu0 0.0
  %165 = vmatpush1.msra.mxu0 0.0
  %166 = vmatprep.subr.mxu0 0.0
  %167 = vmatpush1.msra.mxu0 0.0
  %168 = vmatprep.subr.mxu0 0.0
  %169 = vmatpush1.msra.mxu0 0.0
  %170 = vmatprep.subr.mxu0 0.0
  %171 = vmatpush1.msra.mxu0 0.0
  %172 = vmatprep.subr.mxu0 0.0
  %173 = vmatpush1.msra.mxu0 0.0
  %174 = vmatprep.subr.mxu0 0.0
  %175 = vmatpush1.msra.mxu0 %v140
  %176 = vmatprep.subr.mxu0 0.0
  %177 = vmatpush1.msra.mxu0 %v139
  %178 = vmatprep.subr.mxu0 0.0
  %179 = vmatpush1.msra.mxu0 %v138
  %180 = vmatprep.subr.mxu0 0.0
  %181 = vmatpush1.msra.mxu0 %v137
  %182 = vmatprep.subr.mxu0 0.0
  %183 = vmatpush1.msra.mxu0 %v136
  %184 = vmatprep.subr.mxu0 0.0
  %185 = vmatpush1.msra.mxu0 %v135
  %186 = vmatprep.subr.mxu0 0.0
  %187 = vmatpush1.msra.mxu0 %v134
  %188 = vmatprep.subr.mxu0 0.0
  %189 = vmatpush1.msra.mxu0 %v133
  %190 = vmatprep.subr.mxu0 0.0
  %191 = vmatpush2.msra.mxu0 0.0
  %192 = vmatprep.subr.mxu0 0.0
  %193 = vmatpush2.msra.mxu0 0.0
  %194 = vmatprep.subr.mxu0 0.0
  %195 = vmatpush2.msra.mxu0 0.0
  %196 = vmatprep.subr.mxu0 0.0
  %197 = vmatpush2.msra.mxu0 0.0
  %198 = vmatprep.subr.mxu0 0.0
  %199 = vmatpush2.msra.mxu0 0.0
  %200 = vmatprep.subr.mxu0 0.0
  %201 = vmatpush2.msra.mxu0 0.0
  %202 = vmatprep.subr.mxu0 0.0
  %203 = vmatpush2.msra.mxu0 0.0
  %204 = vmatprep.subr.mxu0 0.0
  %205 = vmatpush2.msra.mxu0 0.0
  %206 = vmatprep.subr.mxu0 0.0
  %207 = vmatpush2.msra.mxu0 0.0
  %208 = vmatprep.subr.mxu0 0.0
  %209 = vmatpush2.msra.mxu0 0.0
  %210 = vmatprep.subr.mxu0 0.0
  %211 = vmatpush2.msra.mxu0 0.0
  %212 = vmatprep.subr.mxu0 0.0
  %213 = vmatpush2.msra.mxu0 0.0
  %214 = vmatprep.subr.mxu0 0.0
  %215 = vmatpush2.msra.mxu0 0.0
  %216 = vmatprep.subr.mxu0 0.0
  %217 = vmatpush2.msra.mxu0 0.0
  %218 = vmatprep.subr.mxu0 0.0
  %219 = vmatpush2.msra.mxu0 0.0
  %220 = vmatprep.subr.mxu0 0.0
  %221 = vmatpush2.msra.mxu0 0.0
  %222 = vmatprep.mubr.f32.mxu0 0.0
  %223 = vmatmul.mubr.f32.gmra.mxu0 %v150
  %v224 = vpop.f32.mrf.mxu0
  %v225 = vadd.f32 %v146, %v224
  %v226 = vpop.f32.mrf.mxu0
  %227 = vmatprep.mubr.f32.mxu0 0.0
  %228 = vmatmul.mubr.f32.gmra.mxu0 %v153
  %v229 = vpop.f32.mrf.mxu0
  %v230 = vadd.f32 %v146, %v229
  %v231 = vpop.f32.mrf.mxu0
  %232 = vmatprep.mubr.f32.mxu0 0.0
  %233 = vmatmul.mubr.f32.gmra.mxu0 %v156
  %v234 = vpop.f32.mrf.mxu0
  %v235 = vadd.f32 %v146, %v234
  %v236 = vpop.f32.mrf.mxu0
  %237 = vdwg.mxu0
  %v238 = vmax.f32 %v225, 0.0
  %v239 = vmax.f32 %v230, 0.0
  %v240 = vmax.f32 %v235, 0.0
  %v241 = vld [vmem:[%s5] sm:$0xff]
  %v242 = vld [vmem:[%s5 + $0x8] sm:$0xff]
  %v243 = vld [vmem:[%s5 + $0x10] sm:$0xff]
  %v244 = vld [vmem:[%s5 + $0x18] sm:$0xff]
  %v245 = vld [vmem:[%s6] sm:$0x1]
  %v247 = vlaneseq
  %v248 = vshrl.u32 %v247, 7
  %v249 = vsub.s32 0, %v248
  %v250 = vrot.slane %v245, %v249
  %v253 = vsel %vm40, %v238, 0
  %v256 = vsel %vm40, %v239, 0
  %v259 = vsel %vm40, %v240, 0
  %261 = vmatprep.subr.mxu0 0.0
  %262 = vmatpush1.msra.mxu0 0.0
  %263 = vmatprep.subr.mxu0 0.0
  %264 = vmatpush1.msra.mxu0 0.0
  %265 = vmatprep.subr.mxu0 0.0
  %266 = vmatpush1.msra.mxu0 0.0
  %267 = vmatprep.subr.mxu0 0.0
  %268 = vmatpush1.msra.mxu0 0.0
  %269 = vmatprep.subr.mxu0 0.0
  %270 = vmatpush1.msra.mxu0 0.0
  %271 = vmatprep.subr.mxu0 0.0
  %272 = vmatpush1.msra.mxu0 0.0
  %273 = vmatprep.subr.mxu0 0.0
  %274 = vmatpush1.msra.mxu0 0.0
  %275 = vmatprep.subr.mxu0 0.0
  %276 = vmatpush1.msra.mxu0 0.0
  %277 = vmatprep.subr.mxu0 0.0
  %278 = vmatpush1.msra.mxu0 0.0
  %279 = vmatprep.subr.mxu0 0.0
  %280 = vmatpush1.msra.mxu0 0.0
  %281 = vmatprep.subr.mxu0 0.0
  %282 = vmatpush1.msra.mxu0 0.0
  %283 = vmatprep.subr.mxu0 0.0
  %284 = vmatpush1.msra.mxu0 0.0
  %285 = vmatprep.subr.mxu0 0.0
  %286 = vmatpush1.msra.mxu0 %v244
  %287 = vmatprep.subr.mxu0 0.0
  %288 = vmatpush1.msra.mxu0 %v243
  %289 = vmatprep.subr.mxu0 0.0
  %290 = vmatpush1.msra.mxu0 %v242
  %291 = vmatprep.subr.mxu0 0.0
  %292 = vmatpush1.msra.mxu0 %v241
  %293 = vmatprep.subr.mxu0 0.0
  %294 = vmatpush2.msra.mxu0 0.0
  %295 = vmatprep.subr.mxu0 0.0
  %296 = vmatpush2.msra.mxu0 0.0
  %297 = vmatprep.subr.mxu0 0.0
  %298 = vmatpush2.msra.mxu0 0.0
  %299 = vmatprep.subr.mxu0 0.0
  %300 = vmatpush2.msra.mxu0 0.0
  %301 = vmatprep.subr.mxu0 0.0
  %302 = vmatpush2.msra.mxu0 0.0
  %303 = vmatprep.subr.mxu0 0.0
  %304 = vmatpush2.msra.mxu0 0.0
  %305 = vmatprep.subr.mxu0 0.0
  %306 = vmatpush2.msra.mxu0 0.0
  %307 = vmatprep.subr.mxu0 0.0
  %308 = vmatpush2.msra.mxu0 0.0
  %309 = vmatprep.subr.mxu0 0.0
  %310 = vmatpush2.msra.mxu0 0.0
  %311 = vmatprep.subr.mxu0 0.0
  %312 = vmatpush2.msra.mxu0 0.0
  %313 = vmatprep.subr.mxu0 0.0
  %314 = vmatpush2.msra.mxu0 0.0
  %315 = vmatprep.subr.mxu0 0.0
  %316 = vmatpush2.msra.mxu0 0.0
  %317 = vmatprep.subr.mxu0 0.0
  %318 = vmatpush2.msra.mxu0 0.0
  %319 = vmatprep.subr.mxu0 0.0
  %320 = vmatpush2.msra.mxu0 0.0
  %321 = vmatprep.subr.mxu0 0.0
  %322 = vmatpush2.msra.mxu0 0.0
  %323 = vmatprep.subr.mxu0 0.0
  %324 = vmatpush2.msra.mxu0 0.0
  %325 = vmatprep.mubr.f32.mxu0 0.0
  %326 = vmatmul.mubr.f32.gmra.mxu0 %v253
  %v327 = vpop.f32.mrf.mxu0
  %v328 = vadd.f32 %v250, %v327
  %v329 = vpop.f32.mrf.mxu0
  %330 = vmatprep.mubr.f32.mxu0 0.0
  %331 = vmatmul.mubr.f32.gmra.mxu0 %v256
  %v332 = vpop.f32.mrf.mxu0
  %v333 = vadd.f32 %v250, %v332
  %v334 = vpop.f32.mrf.mxu0
  %335 = vmatprep.mubr.f32.mxu0 0.0
  %336 = vmatmul.mubr.f32.gmra.mxu0 %v259
  %v337 = vpop.f32.mrf.mxu0
  %v338 = vadd.f32 %v250, %v337
  %v339 = vpop.f32.mrf.mxu0
  %340 = vdwg.mxu0
  %v341 = vmul.f32 %v328, 0.5
  %v342 = vmul.f32 %v333, 0.5
  %v343 = vmul.f32 %v338, 0.5
  %v344 = vtanh.pop %v341
  %v345 = vtanh.pop %v342
  %v346 = vtanh.pop %v343
  %v347 = vadd.f32 %v344, 1.0
  %v348 = vadd.f32 %v345, 1.0
  %v349 = vadd.f32 %v346, 1.0
  %v350 = vmul.f32 %v347, 0.5
  %v351 = vmul.f32 %v348, 0.5
  %v352 = vmul.f32 %v349, 0.5
  %vm353 = vcmask 31744
  %354 = vst.msk [vmem:[%s7] sm:$0xff] %vm353, %v350
  %355 = vst.msk [vmem:[%s7 + $0x8] sm:$0xff] %vm353, %v351
  %356 = vst.msk [vmem:[%s7 + $0x10] sm:$0xff] %vm353, %v352
  // Predicated region
  $region30: #{tpu_custom_call.1} parent=0 // pred_check
    _
  $region31: #{tpu_custom_call.1} parent=0 // pred_check_branch
    %358 = sbr.rel (0) target = $region33
  $region32: #{tpu_custom_call.1} parent=0 // pred_region
    _
  $region33: #{tpu_custom_call.1} parent=0 // pred_fallthru
    _
  // Predicated region
  $region34: #{tpu_custom_call.1} parent=0 // pred_check
    _
  $region35: #{tpu_custom_call.1} parent=0 // pred_check_branch
    %360 = sbr.rel (0) target = $region37
  $region36: #{tpu_custom_call.1} parent=0 // pred_region
    _
  $region37: #{tpu_custom_call.1} parent=0 // pred_fallthru
    _

</llo_original>
